<compile_context>
chip_gen: v7x
topology: tpu7x:2x2x1
jax: 0.10.0
libtpu: 0.0.40
codegen_flags: <defaults>
</compile_context>

<pallas_src>
import math
import numpy as np
import jax
import jax.numpy as jnp
from jax import lax
from jax.experimental import pallas as pl
from jax.experimental.pallas import tpu as pltpu

# ---- model hyper-parameters (small, consistent with the module) ----
B = 2            # batch
S = 8            # seq_len
D = 32           # input_dim == embed_dim
H = 4            # num_heads
HD = D // H      # head_dim
HID = 64         # mlp hidden_dim
EPS = 1e-5       # nn.LayerNorm default
R = B * S        # flattened rows processed by the single kernel step
QKVW = 2 * D + H * D   # fused projection width: [Q | K | V@Wo] = 32+32+128 = 192
NEG = -1e9       # cross-batch mask value (large negative, not inf -> no exp artifacts)
VEC_ROWS = 8 + R # packed small-vector array rows (8 vectors + R mask rows)


def _softmax_last(x):
    m = jnp.max(x, axis=-1, keepdims=True)
    e = jnp.exp(x - m)
    # approx=True -> EUP vrcp slot (otherwise idle here)
    return e * pl.reciprocal(jnp.sum(e, axis=-1, keepdims=True), approx=True)


def _layernorm(x, gamma, beta):
    mu = jnp.mean(x, axis=-1, keepdims=True)
    var = jnp.mean((x - mu) ** 2, axis=-1, keepdims=True)
    return (x - mu) * lax.rsqrt(var + EPS) * gamma + beta


def encoder_block_kernel(x_ref, wqkv_ref, w1_ref, w2_ref, vecs_ref, out_ref):
    x = x_ref[...]                     # (R, D)  f32, whole batch flattened
    vecs = vecs_ref[...]               # (VEC_ROWS, 256) f32 packed small vectors + mask
    b_qkv = vecs[0:1, :QKVW]
    b_o   = vecs[1:2, :D]
    g1    = vecs[2:3, :D]
    be1   = vecs[3:4, :D]
    b1    = vecs[4:5, :HID]
    b2    = vecs[5:6, :D]
    g2    = vecs[6:7, :D]
    be2   = vecs[7:8, :D]
    neg_mask = vecs[8:8 + R, :R]       # (R, R) block-diagonal additive mask

    # ---- fused qkv' projection for the whole batch (one MXU call) ----
    # wqkv columns are [Q*1/sqrt(HD) | K | V@Wo(per-head)], pre-folded wrapper-side.
    qkv = jnp.dot(x.astype(jnp.bfloat16), wqkv_ref[...],
                  preferred_element_type=jnp.float32) + b_qkv      # (R, QKVW) f32
    qkvb = qkv.astype(jnp.bfloat16)

    # ---- per-head attention over the flattened batch (block-diagonal mask) ----
    # TODO(synk): only the mask=None path of the module is implemented; a
    # user-provided attention mask (masked_fill branch) is not supported here.
    acc = jnp.zeros((R, D), jnp.float32)
    for h in range(H):
        qh = qkvb[:, h * HD:(h + 1) * HD]                  # (R, HD)
        kh = qkvb[:, D + h * HD:D + (h + 1) * HD]          # (R, HD)
        vh = qkvb[:, 2 * D + h * D:2 * D + (h + 1) * D]    # (R, D)  (Wo already folded)
        # contract last dims of q and k -> no explicit k.T (XLU vxpose)
        logits = lax.dot_general(qh, kh, (((1,), (1,)), ((), ())),
                                 preferred_element_type=jnp.float32)
        attn = _softmax_last(logits + neg_mask)
        acc = acc + jnp.dot(attn.astype(jnp.bfloat16), vh,
                            preferred_element_type=jnp.float32)
    attn_out = acc + b_o

    # ---- residual + LayerNorm1 ----
    x1 = _layernorm(x + attn_out, g1, be1)

    # ---- MLP (Linear -> ReLU -> Linear) + residual + LayerNorm2 ----
    h1 = jnp.maximum(
        jnp.dot(x1.astype(jnp.bfloat16), w1_ref[...],
                preferred_element_type=jnp.float32) + b1, 0.0)
    mlp_out = jnp.dot(h1.astype(jnp.bfloat16), w2_ref[...],
                      preferred_element_type=jnp.float32) + b2
    x2 = _layernorm(x1 + mlp_out, g2, be2)

    # TODO(synk): output last dim is 32 (<128) so this store is lane-masked; a
    # lane-dense (4,128) repack only pays off once B*S / D grow.
    out_ref[...] = x2


def _fold_weights(params):
    """Wrapper-side algebra: fold Wo into the V columns, 1/sqrt(HD) into Q, and
    pack all small bias/LayerNorm vectors + the block-diagonal mask into one array."""
    scale = 1.0 / math.sqrt(HD)
    wqkv_t = params["wqkv"]            # (D, 3D) (in, out), head-interleaved [q|k|v]
    bqkv = params["bqkv"]              # (3D,)
    wo_t = params["wo"]                # (D, D)  (in, out)

    wq, wk, wv = [], [], []
    bq, bk, bv = [], [], []
    for h in range(H):
        base = h * 3 * HD
        wo_h = wo_t[h * HD:(h + 1) * HD, :]                 # (HD, D)
        wq.append(wqkv_t[:, base:base + HD] * scale)
        wk.append(wqkv_t[:, base + HD:base + 2 * HD])
        wv.append(wqkv_t[:, base + 2 * HD:base + 3 * HD] @ wo_h)   # (D, D)
        bq.append(bqkv[base:base + HD] * scale)
        bk.append(bqkv[base + HD:base + 2 * HD])
        bv.append(bqkv[base + 2 * HD:base + 3 * HD] @ wo_h)
    wqkv_f = jnp.concatenate(wq + wk + wv, axis=1)          # (D, QKVW)
    bqkv_f = jnp.concatenate(bq + bk + bv, axis=0)          # (QKVW,)

    # packed small vectors (rows 0..7) + block-diagonal additive mask (rows 8..8+R-1)
    mask_np = np.where(np.arange(R)[:, None] // S == np.arange(R)[None, :] // S,
                       0.0, NEG).astype(np.float32)
    vecs = jnp.zeros((VEC_ROWS, 256), jnp.float32)
    vecs = vecs.at[0, :QKVW].set(bqkv_f)
    vecs = vecs.at[1, :D].set(params["bo"])
    vecs = vecs.at[2, :D].set(params["g1"])
    vecs = vecs.at[3, :D].set(params["beta1"])
    vecs = vecs.at[4, :HID].set(params["b1"])
    vecs = vecs.at[5, :D].set(params["b2"])
    vecs = vecs.at[6, :D].set(params["g2"])
    vecs = vecs.at[7, :D].set(params["beta2"])
    vecs = vecs.at[8:8 + R, :R].set(jnp.asarray(mask_np))

    return (wqkv_f.astype(jnp.bfloat16),
            params["w1"].astype(jnp.bfloat16),
            params["w2"].astype(jnp.bfloat16),
            vecs)


def encoder_block(x, params):
    """x: (B, S, D) float32; params: dict of pre-transposed (in, out) weights."""
    wqkv_bf, w1_bf, w2_bf, vecs = _fold_weights(params)
    xf = x.reshape(R, D)

    vmem = lambda: pl.BlockSpec(memory_space=pltpu.MemorySpace.VMEM)
    out = pl.pallas_call(
        encoder_block_kernel,
        out_shape=jax.ShapeDtypeStruct((R, D), jnp.float32),
        in_specs=[vmem() for _ in range(5)],
        out_specs=vmem(),
    )(xf, wqkv_bf, w1_bf, w2_bf, vecs)
    return out.reshape(B, S, D)


# ---------------- parameter init (deterministic, in-script) ----------------
def xavier_uniform(key, shape):
    fan_out, fan_in = shape  # PyTorch Linear weight is (out, in)
    bound = math.sqrt(6.0 / (fan_in + fan_out))
    return jax.random.uniform(key, shape, jnp.float32, -bound, bound)


def linear_default(key, shape):
    # PyTorch default Linear weight init: U(-1/sqrt(fan_in), 1/sqrt(fan_in))
    fan_in = shape[1]
    bound = 1.0 / math.sqrt(fan_in)
    return jax.random.uniform(key, shape, jnp.float32, -bound, bound)


def linear_bias(key, n, fan_in):
    bound = 1.0 / math.sqrt(fan_in)
    return jax.random.uniform(key, (n,), jnp.float32, -bound, bound)


def make_params(key):
    k1, k2, k3, k4, k5, k6 = jax.random.split(key, 6)
    wqkv_pt = xavier_uniform(k1, (3 * D, D))      # PyTorch layout (out, in)
    wo_pt = xavier_uniform(k2, (D, D))
    w1_pt = linear_default(k3, (HID, D))
    b1 = linear_bias(k4, HID, D)
    w2_pt = linear_default(k5, (D, HID))
    b2 = linear_bias(k6, D, HID)
    return {
        # pre-transposed to (in, out) for the kernel; 1-D biases.
        # qkv/o_proj biases are zero, matching the module's resetParameters().
        "wqkv": wqkv_pt.T, "bqkv": jnp.zeros((3 * D,), jnp.float32),
        "wo": wo_pt.T,     "bo": jnp.zeros((D,), jnp.float32),
        "g1": jnp.ones((D,), jnp.float32), "beta1": jnp.zeros((D,), jnp.float32),
        "w1": w1_pt.T, "b1": b1,
        "w2": w2_pt.T, "b2": b2,
        "g2": jnp.ones((D,), jnp.float32), "beta2": jnp.zeros((D,), jnp.float32),
    }


# ---------------- pure-JAX reference (for correctness check) ----------------
def reference(x, p):
    qkv = x @ p["wqkv"] + p["bqkv"]                           # (B,S,3D)
    qkv = qkv.reshape(B, S, H, 3 * HD).transpose(0, 2, 1, 3)  # (B,H,S,3HD)
    q, k, v = jnp.split(qkv, 3, axis=-1)
    logits = jnp.einsum("bhqd,bhkd->bhqk", q, k) / math.sqrt(HD)
    attn = jax.nn.softmax(logits, axis=-1)
    vals = jnp.einsum("bhqk,bhkd->bhqd", attn, v).transpose(0, 2, 1, 3).reshape(B, S, D)
    o = vals @ p["wo"] + p["bo"]
    x = x + o
    x = (x - x.mean(-1, keepdims=True)) / jnp.sqrt(x.var(-1, keepdims=True) + EPS) * p["g1"] + p["beta1"]
    h1 = jax.nn.relu(x @ p["w1"] + p["b1"])
    m = h1 @ p["w2"] + p["b2"]
    x = x + m
    x = (x - x.mean(-1, keepdims=True)) / jnp.sqrt(x.var(-1, keepdims=True) + EPS) * p["g2"] + p["beta2"]
    return x


if __name__ == "__main__":
    key = jax.random.PRNGKey(0)
    kx, kp = jax.random.split(key)
    x = jax.random.normal(kx, (B, S, D), jnp.float32)
    params = make_params(kp)

    out = jax.block_until_ready(encoder_block(x, params))
    ref = reference(x, params)

    assert out.shape == (B, S, D)
    # tolerance covers bf16 matmul operands + approx (EUP) reciprocal in softmax
    assert jnp.allclose(out, ref, atol=3e-2, rtol=3e-2), "mismatch vs reference"
    print("KERNEL_OK")
</pallas_src>

<mosaic_0001>
module attributes {stable_mosaic.version = 11 : i64} {
  func.func @encoder_block_kernel(%arg0: memref<16x32xf32, #tpu.memory_space<vmem>>, %arg1: memref<32x192xbf16, #tpu.memory_space<vmem>>, %arg2: memref<32x64xbf16, #tpu.memory_space<vmem>>, %arg3: memref<64x32xbf16, #tpu.memory_space<vmem>>, %arg4: memref<24x256xf32, #tpu.memory_space<vmem>>, %arg5: memref<16x32xf32, #tpu.memory_space<vmem>>) attributes {dimension_semantics = [], scalar_prefetch = 0 : i64, scratch_operands = 0 : i64, tpu.core_type = #tpu.core_type<tc>} {
    %c0 = arith.constant 0 : index
    %c0_0 = arith.constant 0 : index
    %0 = vector.load %arg0[%c0, %c0_0] : memref<16x32xf32, #tpu.memory_space<vmem>>, vector<16x32xf32>
    %c0_1 = arith.constant 0 : index
    %c0_2 = arith.constant 0 : index
    %1 = vector.load %arg4[%c0_1, %c0_2] : memref<24x256xf32, #tpu.memory_space<vmem>>, vector<24x256xf32>
    %2 = vector.extract_strided_slice %1 {offsets = [0, 0], sizes = [1, 192], strides = [1, 1]} : vector<24x256xf32> to vector<1x192xf32>
    %3 = vector.extract_strided_slice %1 {offsets = [1, 0], sizes = [1, 32], strides = [1, 1]} : vector<24x256xf32> to vector<1x32xf32>
    %4 = vector.extract_strided_slice %1 {offsets = [2, 0], sizes = [1, 32], strides = [1, 1]} : vector<24x256xf32> to vector<1x32xf32>
    %5 = vector.extract_strided_slice %1 {offsets = [3, 0], sizes = [1, 32], strides = [1, 1]} : vector<24x256xf32> to vector<1x32xf32>
    %6 = vector.extract_strided_slice %1 {offsets = [4, 0], sizes = [1, 64], strides = [1, 1]} : vector<24x256xf32> to vector<1x64xf32>
    %7 = vector.extract_strided_slice %1 {offsets = [5, 0], sizes = [1, 32], strides = [1, 1]} : vector<24x256xf32> to vector<1x32xf32>
    %8 = vector.extract_strided_slice %1 {offsets = [6, 0], sizes = [1, 32], strides = [1, 1]} : vector<24x256xf32> to vector<1x32xf32>
    %9 = vector.extract_strided_slice %1 {offsets = [7, 0], sizes = [1, 32], strides = [1, 1]} : vector<24x256xf32> to vector<1x32xf32>
    %10 = vector.extract_strided_slice %1 {offsets = [8, 0], sizes = [16, 16], strides = [1, 1]} : vector<24x256xf32> to vector<16x16xf32>
    %11 = arith.truncf %0 : vector<16x32xf32> to vector<16x32xbf16>
    %c0_3 = arith.constant 0 : index
    %c0_4 = arith.constant 0 : index
    %12 = vector.load %arg1[%c0_3, %c0_4] : memref<32x192xbf16, #tpu.memory_space<vmem>>, vector<32x192xbf16>
    %cst = arith.constant dense<0.000000e+00> : vector<16x192xf32>
    %13 = tpu.matmul %11, %12, %cst {dimension_numbers = #tpu.dot_dimension_numbers<[1], [0], [0], [1], [0, 0, 1, 1], [], []>} : vector<16x32xbf16>, vector<32x192xbf16>, vector<16x192xf32> -> vector<16x192xf32>
    %14 = vector.broadcast %2 : vector<1x192xf32> to vector<16x192xf32>
    %15 = arith.addf %13, %14 : vector<16x192xf32>
    %16 = arith.truncf %15 : vector<16x192xf32> to vector<16x192xbf16>
    %cst_5 = arith.constant 0.000000e+00 : f32
    %17 = vector.broadcast %cst_5 : f32 to vector<16x32xf32>
    %18 = vector.extract_strided_slice %16 {offsets = [0, 0], sizes = [16, 8], strides = [1, 1]} : vector<16x192xbf16> to vector<16x8xbf16>
    %19 = vector.extract_strided_slice %16 {offsets = [0, 32], sizes = [16, 8], strides = [1, 1]} : vector<16x192xbf16> to vector<16x8xbf16>
    %20 = vector.extract_strided_slice %16 {offsets = [0, 64], sizes = [16, 32], strides = [1, 1]} : vector<16x192xbf16> to vector<16x32xbf16>
    %cst_6 = arith.constant dense<0.000000e+00> : vector<16x16xf32>
    %21 = tpu.matmul %18, %19, %cst_6 {dimension_numbers = #tpu.dot_dimension_numbers<[1], [1], [0], [0], [0, 0, 1, 0], [], []>} : vector<16x8xbf16>, vector<16x8xbf16>, vector<16x16xf32> -> vector<16x16xf32>
    %22 = arith.addf %21, %10 : vector<16x16xf32>
    %cst_7 = arith.constant dense<0xFF800000> : vector<16xf32>
    %23 = vector.multi_reduction <maximumf>, %22, %cst_7 [1] : vector<16x16xf32> to vector<16xf32>
    %24 = vector.shape_cast %23 : vector<16xf32> to vector<16x1xf32>
    %25 = vector.broadcast %24 : vector<16x1xf32> to vector<16x16xf32>
    %26 = arith.subf %22, %25 : vector<16x16xf32>
    %27 = math.exp %26 : vector<16x16xf32>
    %cst_8 = arith.constant dense<0.000000e+00> : vector<16xf32>
    %28 = vector.multi_reduction <add>, %27, %cst_8 [1] : vector<16x16xf32> to vector<16xf32>
    %29 = vector.shape_cast %28 : vector<16xf32> to vector<16x1xf32>
    %30 = tpu.reciprocal %29 {approx = true} : vector<16x1xf32> -> vector<16x1xf32>
    %31 = vector.broadcast %30 : vector<16x1xf32> to vector<16x16xf32>
    %32 = arith.mulf %27, %31 : vector<16x16xf32>
    %33 = arith.truncf %32 : vector<16x16xf32> to vector<16x16xbf16>
    %cst_9 = arith.constant dense<0.000000e+00> : vector<16x32xf32>
    %34 = tpu.matmul %33, %20, %cst_9 {dimension_numbers = #tpu.dot_dimension_numbers<[1], [0], [0], [1], [0, 0, 1, 1], [], []>} : vector<16x16xbf16>, vector<16x32xbf16>, vector<16x32xf32> -> vector<16x32xf32>
    %35 = arith.addf %17, %34 : vector<16x32xf32>
    %36 = vector.extract_strided_slice %16 {offsets = [0, 8], sizes = [16, 8], strides = [1, 1]} : vector<16x192xbf16> to vector<16x8xbf16>
    %37 = vector.extract_strided_slice %16 {offsets = [0, 40], sizes = [16, 8], strides = [1, 1]} : vector<16x192xbf16> to vector<16x8xbf16>
    %38 = vector.extract_strided_slice %16 {offsets = [0, 96], sizes = [16, 32], strides = [1, 1]} : vector<16x192xbf16> to vector<16x32xbf16>
    %cst_10 = arith.constant dense<0.000000e+00> : vector<16x16xf32>
    %39 = tpu.matmul %36, %37, %cst_10 {dimension_numbers = #tpu.dot_dimension_numbers<[1], [1], [0], [0], [0, 0, 1, 0], [], []>} : vector<16x8xbf16>, vector<16x8xbf16>, vector<16x16xf32> -> vector<16x16xf32>
    %40 = arith.addf %39, %10 : vector<16x16xf32>
    %cst_11 = arith.constant dense<0xFF800000> : vector<16xf32>
    %41 = vector.multi_reduction <maximumf>, %40, %cst_11 [1] : vector<16x16xf32> to vector<16xf32>
    %42 = vector.shape_cast %41 : vector<16xf32> to vector<16x1xf32>
    %43 = vector.broadcast %42 : vector<16x1xf32> to vector<16x16xf32>
    %44 = arith.subf %40, %43 : vector<16x16xf32>
    %45 = math.exp %44 : vector<16x16xf32>
    %cst_12 = arith.constant dense<0.000000e+00> : vector<16xf32>
    %46 = vector.multi_reduction <add>, %45, %cst_12 [1] : vector<16x16xf32> to vector<16xf32>
    %47 = vector.shape_cast %46 : vector<16xf32> to vector<16x1xf32>
    %48 = tpu.reciprocal %47 {approx = true} : vector<16x1xf32> -> vector<16x1xf32>
    %49 = vector.broadcast %48 : vector<16x1xf32> to vector<16x16xf32>
    %50 = arith.mulf %45, %49 : vector<16x16xf32>
    %51 = arith.truncf %50 : vector<16x16xf32> to vector<16x16xbf16>
    %cst_13 = arith.constant dense<0.000000e+00> : vector<16x32xf32>
    %52 = tpu.matmul %51, %38, %cst_13 {dimension_numbers = #tpu.dot_dimension_numbers<[1], [0], [0], [1], [0, 0, 1, 1], [], []>} : vector<16x16xbf16>, vector<16x32xbf16>, vector<16x32xf32> -> vector<16x32xf32>
    %53 = arith.addf %35, %52 : vector<16x32xf32>
    %54 = vector.extract_strided_slice %16 {offsets = [0, 16], sizes = [16, 8], strides = [1, 1]} : vector<16x192xbf16> to vector<16x8xbf16>
    %55 = vector.extract_strided_slice %16 {offsets = [0, 48], sizes = [16, 8], strides = [1, 1]} : vector<16x192xbf16> to vector<16x8xbf16>
    %56 = vector.extract_strided_slice %16 {offsets = [0, 128], sizes = [16, 32], strides = [1, 1]} : vector<16x192xbf16> to vector<16x32xbf16>
    %cst_14 = arith.constant dense<0.000000e+00> : vector<16x16xf32>
    %57 = tpu.matmul %54, %55, %cst_14 {dimension_numbers = #tpu.dot_dimension_numbers<[1], [1], [0], [0], [0, 0, 1, 0], [], []>} : vector<16x8xbf16>, vector<16x8xbf16>, vector<16x16xf32> -> vector<16x16xf32>
    %58 = arith.addf %57, %10 : vector<16x16xf32>
    %cst_15 = arith.constant dense<0xFF800000> : vector<16xf32>
    %59 = vector.multi_reduction <maximumf>, %58, %cst_15 [1] : vector<16x16xf32> to vector<16xf32>
    %60 = vector.shape_cast %59 : vector<16xf32> to vector<16x1xf32>
    %61 = vector.broadcast %60 : vector<16x1xf32> to vector<16x16xf32>
    %62 = arith.subf %58, %61 : vector<16x16xf32>
    %63 = math.exp %62 : vector<16x16xf32>
    %cst_16 = arith.constant dense<0.000000e+00> : vector<16xf32>
    %64 = vector.multi_reduction <add>, %63, %cst_16 [1] : vector<16x16xf32> to vector<16xf32>
    %65 = vector.shape_cast %64 : vector<16xf32> to vector<16x1xf32>
    %66 = tpu.reciprocal %65 {approx = true} : vector<16x1xf32> -> vector<16x1xf32>
    %67 = vector.broadcast %66 : vector<16x1xf32> to vector<16x16xf32>
    %68 = arith.mulf %63, %67 : vector<16x16xf32>
    %69 = arith.truncf %68 : vector<16x16xf32> to vector<16x16xbf16>
    %cst_17 = arith.constant dense<0.000000e+00> : vector<16x32xf32>
    %70 = tpu.matmul %69, %56, %cst_17 {dimension_numbers = #tpu.dot_dimension_numbers<[1], [0], [0], [1], [0, 0, 1, 1], [], []>} : vector<16x16xbf16>, vector<16x32xbf16>, vector<16x32xf32> -> vector<16x32xf32>
    %71 = arith.addf %53, %70 : vector<16x32xf32>
    %72 = vector.extract_strided_slice %16 {offsets = [0, 24], sizes = [16, 8], strides = [1, 1]} : vector<16x192xbf16> to vector<16x8xbf16>
    %73 = vector.extract_strided_slice %16 {offsets = [0, 56], sizes = [16, 8], strides = [1, 1]} : vector<16x192xbf16> to vector<16x8xbf16>
    %74 = vector.extract_strided_slice %16 {offsets = [0, 160], sizes = [16, 32], strides = [1, 1]} : vector<16x192xbf16> to vector<16x32xbf16>
    %cst_18 = arith.constant dense<0.000000e+00> : vector<16x16xf32>
    %75 = tpu.matmul %72, %73, %cst_18 {dimension_numbers = #tpu.dot_dimension_numbers<[1], [1], [0], [0], [0, 0, 1, 0], [], []>} : vector<16x8xbf16>, vector<16x8xbf16>, vector<16x16xf32> -> vector<16x16xf32>
    %76 = arith.addf %75, %10 : vector<16x16xf32>
    %cst_19 = arith.constant dense<0xFF800000> : vector<16xf32>
    %77 = vector.multi_reduction <maximumf>, %76, %cst_19 [1] : vector<16x16xf32> to vector<16xf32>
    %78 = vector.shape_cast %77 : vector<16xf32> to vector<16x1xf32>
    %79 = vector.broadcast %78 : vector<16x1xf32> to vector<16x16xf32>
    %80 = arith.subf %76, %79 : vector<16x16xf32>
    %81 = math.exp %80 : vector<16x16xf32>
    %cst_20 = arith.constant dense<0.000000e+00> : vector<16xf32>
    %82 = vector.multi_reduction <add>, %81, %cst_20 [1] : vector<16x16xf32> to vector<16xf32>
    %83 = vector.shape_cast %82 : vector<16xf32> to vector<16x1xf32>
    %84 = tpu.reciprocal %83 {approx = true} : vector<16x1xf32> -> vector<16x1xf32>
    %85 = vector.broadcast %84 : vector<16x1xf32> to vector<16x16xf32>
    %86 = arith.mulf %81, %85 : vector<16x16xf32>
    %87 = arith.truncf %86 : vector<16x16xf32> to vector<16x16xbf16>
    %cst_21 = arith.constant dense<0.000000e+00> : vector<16x32xf32>
    %88 = tpu.matmul %87, %74, %cst_21 {dimension_numbers = #tpu.dot_dimension_numbers<[1], [0], [0], [1], [0, 0, 1, 1], [], []>} : vector<16x16xbf16>, vector<16x32xbf16>, vector<16x32xf32> -> vector<16x32xf32>
    %89 = arith.addf %71, %88 : vector<16x32xf32>
    %90 = vector.broadcast %3 : vector<1x32xf32> to vector<16x32xf32>
    %91 = arith.addf %89, %90 : vector<16x32xf32>
    %92 = arith.addf %0, %91 : vector<16x32xf32>
    %cst_22 = arith.constant dense<0.000000e+00> : vector<16xf32>
    %93 = vector.multi_reduction <add>, %92, %cst_22 [1] : vector<16x32xf32> to vector<16xf32>
    %94 = vector.shape_cast %93 : vector<16xf32> to vector<16x1xf32>
    %cst_23 = arith.constant 3.200000e+01 : f32
    %95 = vector.broadcast %cst_23 : f32 to vector<16x1xf32>
    %96 = arith.divf %94, %95 : vector<16x1xf32>
    %97 = vector.broadcast %96 : vector<16x1xf32> to vector<16x32xf32>
    %98 = arith.subf %92, %97 : vector<16x32xf32>
    %99 = arith.mulf %98, %98 : vector<16x32xf32>
    %cst_24 = arith.constant dense<0.000000e+00> : vector<16xf32>
    %100 = vector.multi_reduction <add>, %99, %cst_24 [1] : vector<16x32xf32> to vector<16xf32>
    %101 = vector.shape_cast %100 : vector<16xf32> to vector<16x1xf32>
    %cst_25 = arith.constant 3.200000e+01 : f32
    %102 = vector.broadcast %cst_25 : f32 to vector<16x1xf32>
    %103 = arith.divf %101, %102 : vector<16x1xf32>
    %104 = vector.broadcast %96 : vector<16x1xf32> to vector<16x32xf32>
    %105 = arith.subf %92, %104 : vector<16x32xf32>
    %cst_26 = arith.constant 9.99999974E-6 : f32
    %106 = vector.broadcast %cst_26 : f32 to vector<16x1xf32>
    %107 = arith.addf %103, %106 : vector<16x1xf32>
    %108 = math.rsqrt %107 : vector<16x1xf32>
    %109 = vector.broadcast %108 : vector<16x1xf32> to vector<16x32xf32>
    %110 = arith.mulf %105, %109 : vector<16x32xf32>
    %111 = vector.broadcast %4 : vector<1x32xf32> to vector<16x32xf32>
    %112 = arith.mulf %110, %111 : vector<16x32xf32>
    %113 = vector.broadcast %5 : vector<1x32xf32> to vector<16x32xf32>
    %114 = arith.addf %112, %113 : vector<16x32xf32>
    %115 = arith.truncf %114 : vector<16x32xf32> to vector<16x32xbf16>
    %c0_27 = arith.constant 0 : index
    %c0_28 = arith.constant 0 : index
    %116 = vector.load %arg2[%c0_27, %c0_28] : memref<32x64xbf16, #tpu.memory_space<vmem>>, vector<32x64xbf16>
    %cst_29 = arith.constant dense<0.000000e+00> : vector<16x64xf32>
    %117 = tpu.matmul %115, %116, %cst_29 {dimension_numbers = #tpu.dot_dimension_numbers<[1], [0], [0], [1], [0, 0, 1, 1], [], []>} : vector<16x32xbf16>, vector<32x64xbf16>, vector<16x64xf32> -> vector<16x64xf32>
    %118 = vector.broadcast %6 : vector<1x64xf32> to vector<16x64xf32>
    %119 = arith.addf %117, %118 : vector<16x64xf32>
    %cst_30 = arith.constant 0.000000e+00 : f32
    %120 = vector.broadcast %cst_30 : f32 to vector<16x64xf32>
    %121 = arith.maximumf %119, %120 : vector<16x64xf32>
    %122 = arith.truncf %121 : vector<16x64xf32> to vector<16x64xbf16>
    %c0_31 = arith.constant 0 : index
    %c0_32 = arith.constant 0 : index
    %123 = vector.load %arg3[%c0_31, %c0_32] : memref<64x32xbf16, #tpu.memory_space<vmem>>, vector<64x32xbf16>
    %cst_33 = arith.constant dense<0.000000e+00> : vector<16x32xf32>
    %124 = tpu.matmul %122, %123, %cst_33 {dimension_numbers = #tpu.dot_dimension_numbers<[1], [0], [0], [1], [0, 0, 1, 1], [], []>} : vector<16x64xbf16>, vector<64x32xbf16>, vector<16x32xf32> -> vector<16x32xf32>
    %125 = vector.broadcast %7 : vector<1x32xf32> to vector<16x32xf32>
    %126 = arith.addf %124, %125 : vector<16x32xf32>
    %127 = arith.addf %114, %126 : vector<16x32xf32>
    %cst_34 = arith.constant dense<0.000000e+00> : vector<16xf32>
    %128 = vector.multi_reduction <add>, %127, %cst_34 [1] : vector<16x32xf32> to vector<16xf32>
    %129 = vector.shape_cast %128 : vector<16xf32> to vector<16x1xf32>
    %cst_35 = arith.constant 3.200000e+01 : f32
    %130 = vector.broadcast %cst_35 : f32 to vector<16x1xf32>
    %131 = arith.divf %129, %130 : vector<16x1xf32>
    %132 = vector.broadcast %131 : vector<16x1xf32> to vector<16x32xf32>
    %133 = arith.subf %127, %132 : vector<16x32xf32>
    %134 = arith.mulf %133, %133 : vector<16x32xf32>
    %cst_36 = arith.constant dense<0.000000e+00> : vector<16xf32>
    %135 = vector.multi_reduction <add>, %134, %cst_36 [1] : vector<16x32xf32> to vector<16xf32>
    %136 = vector.shape_cast %135 : vector<16xf32> to vector<16x1xf32>
    %cst_37 = arith.constant 3.200000e+01 : f32
    %137 = vector.broadcast %cst_37 : f32 to vector<16x1xf32>
    %138 = arith.divf %136, %137 : vector<16x1xf32>
    %139 = vector.broadcast %131 : vector<16x1xf32> to vector<16x32xf32>
    %140 = arith.subf %127, %139 : vector<16x32xf32>
    %cst_38 = arith.constant 9.99999974E-6 : f32
    %141 = vector.broadcast %cst_38 : f32 to vector<16x1xf32>
    %142 = arith.addf %138, %141 : vector<16x1xf32>
    %143 = math.rsqrt %142 : vector<16x1xf32>
    %144 = vector.broadcast %143 : vector<16x1xf32> to vector<16x32xf32>
    %145 = arith.mulf %140, %144 : vector<16x32xf32>
    %146 = vector.broadcast %8 : vector<1x32xf32> to vector<16x32xf32>
    %147 = arith.mulf %145, %146 : vector<16x32xf32>
    %148 = vector.broadcast %9 : vector<1x32xf32> to vector<16x32xf32>
    %149 = arith.addf %147, %148 : vector<16x32xf32>
    %c0_39 = arith.constant 0 : index
    %c0_40 = arith.constant 0 : index
    %150 = vector.load %arg5[%c0_39, %c0_40] : memref<16x32xf32, #tpu.memory_space<vmem>>, vector<16x32xf32>
    tpu.vector_store %arg5[%c0_39, %c0_40], %149 {strides = array<i32>} : memref<16x32xf32, #tpu.memory_space<vmem>>, vector<16x32xf32>,
    return
  }
}

</mosaic_0001>

<llo_original>
// kernel: tpu_custom_call.1
$region0: #{tpu_custom_call.1}
  #allocation0 [shape = 'u32[]', space=smem, size = 0x4, offset = 0x4, fixed_abs, tag = 'smem constant byte address 0x4 - core index']
  #allocation1 [shape = 'u32[144,128]{1,0:T(1,128)}', space=vmem, size = 0x12000, scoped, tag = 'internal scratch']
  %s0 = inlined_call_operand.hbm [shape: f32[16,32], index: 0, kind: input, shape index: {}]
  %s1 = inlined_call_operand.hbm [shape: bf16[32,192], index: 1, kind: input, shape index: {}]
  %s2 = inlined_call_operand.hbm [shape: bf16[32,64], index: 2, kind: input, shape index: {}]
  %s3 = inlined_call_operand.vmem [shape: bf16[64,32], index: 3, kind: input, shape index: {}]
  %s4 = inlined_call_operand.vmem [shape: f32[24,256], index: 4, kind: input, shape index: {}]
  %s5 = inlined_call_operand.hbm [shape: f32[16,32], index: 5, kind: output, shape index: {}]
  %s6 = sld [smem:[#allocation0]]
  $region42: #{tpu_custom_call.1} parent=0
    _
  %s8 = ssub.s32 1, %s6
  %s9 = scalar_select 0, %s8, %s6
  $region1: #{tpu_custom_call.1} parent=0
    #allocation2 [shape = 'u8[8192]{0}', space=vmem, size = 0x2000, scoped, tag = 'input window, operand 0, single buffered']
    #allocation3 [shape = 's32[1]{0}', space=sflag, size = 0x4, scoped, tag = 'scoped memory for tpu_custom_call.1']
    #allocation4 [shape = 's32[1]{0}', space=sflag, size = 0x4, scoped, tag = 'scoped memory for tpu_custom_call.1']
    #allocation5 [shape = 'u8[16384]{0}', space=vmem, size = 0x4000, scoped, tag = 'input window, operand 1, single buffered']
    #allocation6 [shape = 's32[1]{0}', space=sflag, size = 0x4, scoped, tag = 'scoped memory for tpu_custom_call.1']
    #allocation7 [shape = 'u8[8192]{0}', space=vmem, size = 0x2000, scoped, tag = 'input window, operand 2, single buffered']
    #allocation8 [shape = 'u8[8192]{0}', space=vmem, size = 0x2000, scoped, tag = 'output window, operand 0, single buffered']
    %10 = vsyncpa [#allocation3], 0
    %11 = vsyncpa [#allocation6], 0
    %12 = vsyncpa [#allocation4], 0
    // Predicated region
    $region2: #{tpu_custom_call.1} parent=1 // pred_check
      _
    $region3: #{tpu_custom_call.1} parent=1 // pred_check_branch
      %14 = sbr.rel (0) target = $region5
    $region4: #{tpu_custom_call.1} parent=1 // pred_region
      %s16 = ssub.s32 256, 256
      %17 = vsyncadd [#allocation3], %s16
      %s18 = sshll.u32 [#allocation2], 4
      %s19 = int_to_ptr.vmem [resolvable:$true] %s18
      %24 = dma.hbm_to_vmem [thread:$0]  %s0, 256, %s19, [#allocation3], 128, 128, 8
    $region5: #{tpu_custom_call.1} parent=1 // pred_fallthru
      _
    // Predicated region
    $region6: #{tpu_custom_call.1} parent=1 // pred_check
      _
    $region7: #{tpu_custom_call.1} parent=1 // pred_check_branch
      %26 = sbr.rel (0) target = $region9
    $region8: #{tpu_custom_call.1} parent=1 // pred_region
      %s28 = ssub.s32 512, 512
      %29 = vsyncadd [#allocation6], %s28
      %s30 = sshll.u32 [#allocation5], 4
      %s31 = int_to_ptr.vmem [resolvable:$true] %s30
      %36 = dma.hbm_to_vmem [thread:$0]  %s1, 512, %s31, [#allocation6], 128, 128, 8
    $region9: #{tpu_custom_call.1} parent=1 // pred_fallthru
      _
    // Predicated region
    $region10: #{tpu_custom_call.1} parent=1 // pred_check
      _
    $region11: #{tpu_custom_call.1} parent=1 // pred_check_branch
      %38 = sbr.rel (0) target = $region13
    $region12: #{tpu_custom_call.1} parent=1 // pred_region
      %s40 = ssub.s32 256, 256
      %41 = vsyncadd [#allocation6], %s40
      %s42 = sshll.u32 [#allocation7], 4
      %s43 = int_to_ptr.vmem [resolvable:$true] %s42
      %48 = dma.hbm_to_vmem [thread:$0]  %s2, 256, %s43, [#allocation6], 64, 64, 4
    $region13: #{tpu_custom_call.1} parent=1 // pred_fallthru
      _
    // Predicated region
    $region14: #{tpu_custom_call.1} parent=1 // pred_check
      _
    $region15: #{tpu_custom_call.1} parent=1 // pred_check_branch
      %50 = sbr.rel (0) target = $region17
    $region16: #{tpu_custom_call.1} parent=1 // pred_region
      _
    $region17: #{tpu_custom_call.1} parent=1 // pred_fallthru
      _
    // Predicated region
    $region18: #{tpu_custom_call.1} parent=1 // pred_check
      _
    $region19: #{tpu_custom_call.1} parent=1 // pred_check_branch
      %52 = sbr.rel (0) target = $region21
    $region20: #{tpu_custom_call.1} parent=1 // pred_region
      _
    $region21: #{tpu_custom_call.1} parent=1 // pred_fallthru
      _
    // Predicated region
    $region22: #{tpu_custom_call.1} parent=1 // pred_check
      _
    $region23: #{tpu_custom_call.1} parent=1 // pred_check_branch
      %54 = sbr.rel (0) target = $region25
    $region24: #{tpu_custom_call.1} parent=1 // pred_region
      %55 = dma.done [#allocation3], 256
    $region25: #{tpu_custom_call.1} parent=1 // pred_fallthru
      _
    // Predicated region
    $region26: #{tpu_custom_call.1} parent=1 // pred_check
      _
    $region27: #{tpu_custom_call.1} parent=1 // pred_check_branch
      %57 = sbr.rel (0) target = $region29
    $region28: #{tpu_custom_call.1} parent=1 // pred_region
      %58 = dma.done [#allocation6], 512
    $region29: #{tpu_custom_call.1} parent=1 // pred_fallthru
      _
    // Predicated region
    $region30: #{tpu_custom_call.1} parent=1 // pred_check
      _
    $region31: #{tpu_custom_call.1} parent=1 // pred_check_branch
      %60 = sbr.rel (0) target = $region33
    $region32: #{tpu_custom_call.1} parent=1 // pred_region
      %61 = dma.done [#allocation6], 256
    $region33: #{tpu_custom_call.1} parent=1 // pred_fallthru
      _
    %v63 = vld [vmem:[#allocation2] sm:$0xff]
    %v64 = vld [vmem:[#allocation2 + $0x8] sm:$0xff]
    %v65 = vld [vmem:[%s4] sm:$0xff]
    %v66 = vld [vmem:[%s4 + $0x8] sm:$0xff]
    %v67 = vld [vmem:[%s4 + $0x10] sm:$0xff]
    %v68 = vld [vmem:[%s4 + $0x20] sm:$0xff]
    %v69 = vpack.c.bf16 %v64, %v63
    %v70 = vld [vmem:[#allocation5] sm:$0xff]
    %v71 = vld [vmem:[#allocation5 + $0x8] sm:$0xff]
    %v72 = vld [vmem:[#allocation5 + $0x10] sm:$0xff]
    %v73 = vld [vmem:[#allocation5 + $0x18] sm:$0xff]
    %v74 = vlaneseq
    %v75 = vshrl.u32 %v74, 7
    %v76 = vsub.s32 0, %v75
    %v77 = vrot.slane %v65, %v76
    %v78 = vlaneseq
    %v79 = vshrl.u32 %v78, 7
    %v80 = vsub.s32 0, %v79
    %v81 = vrot.slane %v66, %v80
    %v86 = vunpack.c.l.b16 %v70
    %v87 = vunpack.c.h.b16 %v70
    %v88 = vunpack.c.l.b16 %v71
    %v89 = vunpack.c.h.b16 %v71
    %v90 = vunpack.c.l.b16 %v72
    %v91 = vunpack.c.h.b16 %v72
    %v92 = vunpack.c.l.b16 %v73
    %v93 = vunpack.c.h.b16 %v73
    %v94 = vpack.c.b16 %v88, %v86
    %v95 = vpack.c.b16 %v89, %v87
    %v96 = vpack.c.b16 %v92, %v90
    %v97 = vpack.c.b16 %v93, %v91
    %vm102 = vcmask 261120
    %v104 = vsel %vm102, %v69, 0
    %106 = vmatprep.subr.bf16.mxu0 %v95
    %107 = vmatpush1.bf16.msra.mxu0 %v94
    %108 = vmatprep.subr.bf16.mxu0 %v97
    %109 = vmatpush1.bf16.msra.mxu0 %v96
    %110 = vmatprep.subr.bf16.mxu0 0
    %111 = vmatpush1.bf16.msra.mxu0 0
    %112 = vmatprep.subr.bf16.mxu0 0
    %113 = vmatpush1.bf16.msra.mxu0 0
    %114 = vmatprep.subr.bf16.mxu0 0
    %115 = vmatpush1.bf16.msra.mxu0 0
    %116 = vmatprep.subr.bf16.mxu0 0
    %117 = vmatpush1.bf16.msra.mxu0 0
    %118 = vmatprep.subr.bf16.mxu0 0
    %119 = vmatpush1.bf16.msra.mxu0 0
    %120 = vmatprep.subr.bf16.mxu0 0
    %121 = vmatpush1.bf16.msra.mxu0 0
    %122 = vmatprep.subr.bf16.mxu0 0
    %123 = vmatpush1.bf16.msra.mxu0 0
    %124 = vmatprep.subr.bf16.mxu0 0
    %125 = vmatpush1.bf16.msra.mxu0 0
    %126 = vmatprep.subr.bf16.mxu0 0
    %127 = vmatpush1.bf16.msra.mxu0 0
    %128 = vmatprep.subr.bf16.mxu0 0
    %129 = vmatpush1.bf16.msra.mxu0 0
    %130 = vmatprep.subr.bf16.mxu0 0
    %131 = vmatpush1.bf16.msra.mxu0 0
    %132 = vmatprep.subr.bf16.mxu0 0
    %133 = vmatpush1.bf16.msra.mxu0 0
    %134 = vmatprep.subr.bf16.mxu0 0
    %135 = vmatpush1.bf16.msra.mxu0 0
    %136 = vmatprep.subr.bf16.mxu0 0
    %137 = vmatpush1.bf16.msra.mxu0 0
    %138 = vmatprep.mubr.bf16.mxu0 0
    %139 = vmatmul.mubr.bf16.gmra.mrb[0].mxu0 %v104
    %v140 = vpop.f32.mrb[0].mxu0
    %v141 = vadd.f32 %v77, %v140
    %v142 = vpop.f32.mrb[0].mxu0
    %v143 = vadd.f32 %v81, %v142
    %v144 = vpop.f32.mrb[0].mxu0
    %v145 = vadd.f32 %v77, %v144
    %v146 = vpop.f32.mrb[0].mxu0
    %v147 = vadd.f32 %v81, %v146
    %148 = vdwg.mxu0
    %v149 = vpack.c.bf16 %v145, %v141
    %v150 = vpack.c.bf16 %v147, %v143
    %152 = vrot.lane.b32.xlu0 %v149, 96
    %v153 = vpop.permute.xlu0 %152
    %vm154 = vcmask 64512
    %v156 = vsel %vm154, %v149, 0
    %v159 = vsel %vm154, %v153, 0
    %161 = vmatprep.subr.bf16.mxu0 0
    %162 = vmatpush1.bf16.xpose.msra.mxu0 %v159
    %163 = vmatprep.subr.bf16.mxu0 0
    %164 = vmatpush1.bf16.xpose.msra.mxu0 0
    %165 = vmatprep.subr.bf16.mxu0 0
    %166 = vmatpush1.bf16.xpose.msra.mxu0 0
    %167 = vmatprep.subr.bf16.mxu0 0
    %168 = vmatpush1.bf16.xpose.msra.mxu0 0
    %169 = vmatprep.subr.bf16.mxu0 0
    %170 = vmatpush1.bf16.xpose.msra.mxu0 0
    %171 = vmatprep.subr.bf16.mxu0 0
    %172 = vmatpush1.bf16.xpose.msra.mxu0 0
    %173 = vmatprep.subr.bf16.mxu0 0
    %174 = vmatpush1.bf16.xpose.msra.mxu0 0
    %175 = vmatprep.subr.bf16.mxu0 0
    %176 = vmatpush1.bf16.xpose.msra.mxu0 0
    %177 = vmatprep.subr.bf16.mxu0 0
    %178 = vmatpush1.bf16.xpose.msra.mxu0 0
    %179 = vmatprep.subr.bf16.mxu0 0
    %180 = vmatpush1.bf16.xpose.msra.mxu0 0
    %181 = vmatprep.subr.bf16.mxu0 0
    %182 = vmatpush1.bf16.xpose.msra.mxu0 0
    %183 = vmatprep.subr.bf16.mxu0 0
    %184 = vmatpush1.bf16.xpose.msra.mxu0 0
    %185 = vmatprep.subr.bf16.mxu0 0
    %186 = vmatpush1.bf16.xpose.msra.mxu0 0
    %187 = vmatprep.subr.bf16.mxu0 0
    %188 = vmatpush1.bf16.xpose.msra.mxu0 0
    %189 = vmatprep.subr.bf16.mxu0 0
    %190 = vmatpush1.bf16.xpose.msra.mxu0 0
    %191 = vmatprep.subr.bf16.mxu0 0
    %192 = vmatpush1.bf16.xpose.msra.mxu0 0
    %193 = vmatprep.mubr.bf16.mxu0 0
    %194 = vmatmul.mubr.bf16.gmra.mrb[0].mxu0 %v156
    %v195 = vpop.f32.mrb[0].mxu0
    %v196 = vadd.f32 %v67, %v195
    %v197 = vpop.f32.mrb[0].mxu0
    %v198 = vpop.f32.mrb[0].mxu0
    %v199 = vadd.f32 %v68, %v198
    %v200 = vpop.f32.mrb[0].mxu0
    %201 = vdwg.mxu0
    %vm202 = vcmask 130048
    %v203 = vsel %vm202, %v196, -inf
    %204 = vmax.xlane.f32.xlu0 %v203
    %v205 = vpop.xlane.xlu0 %204
    %v206 = vsel %vm202, %v199, -inf
    %207 = vmax.xlane.f32.xlu0 %v206
    %v208 = vpop.xlane.xlu0 %207
    %v209 = vsub.f32 %v196, %v205
    %v210 = vsub.f32 %v199, %v208
    %v211 = vmul.f32 %v209, 1.442695
    %v212 = vpow.pop %v211
    %v213 = vmul.f32 %v210, 1.442695
    %v214 = vpow.pop %v213
    %v215 = vsel %vm202, %v212, 0.0
    %216 = vadd.xlane.f32.xlu0 %v215
    %v217 = vpop.xlane.xlu0 %216
    %v218 = vsel %vm202, %v214, 0.0
    %219 = vadd.xlane.f32.xlu0 %v218
    %v220 = vpop.xlane.xlu0 %219
    %v221 = vrcp.pop %v217
    %v222 = vrcp.pop %v220
    %v223 = vmul.f32 %v212, %v221
    %v224 = vmul.f32 %v214, %v222
    %v225 = vpack.c.bf16 %v224, %v223
    %226 = vrot.lane.b32.xlu0 %v149, 120
    %v227 = vpop.permute.xlu0 %226
    %228 = vrot.lane.b32.xlu0 %v149, 88
    %v229 = vpop.permute.xlu0 %228
    %v231 = vsel %vm154, %v227, 0
    %v234 = vsel %vm154, %v229, 0
    %236 = vmatprep.subr.bf16.mxu0 0
    %237 = vmatpush1.bf16.xpose.msra.mxu0 %v234
    %238 = vmatprep.subr.bf16.mxu0 0
    %239 = vmatpush1.bf16.xpose.msra.mxu0 0
    %240 = vmatprep.subr.bf16.mxu0 0
    %241 = vmatpush1.bf16.xpose.msra.mxu0 0
    %242 = vmatprep.subr.bf16.mxu0 0
    %243 = vmatpush1.bf16.xpose.msra.mxu0 0
    %244 = vmatprep.subr.bf16.mxu0 0
    %245 = vmatpush1.bf16.xpose.msra.mxu0 0
    %246 = vmatprep.subr.bf16.mxu0 0
    %247 = vmatpush1.bf16.xpose.msra.mxu0 0
    %248 = vmatprep.subr.bf16.mxu0 0
    %249 = vmatpush1.bf16.xpose.msra.mxu0 0
    %250 = vmatprep.subr.bf16.mxu0 0
    %251 = vmatpush1.bf16.xpose.msra.mxu0 0
    %252 = vmatprep.subr.bf16.mxu0 0
    %253 = vmatpush1.bf16.xpose.msra.mxu0 0
    %254 = vmatprep.subr.bf16.mxu0 0
    %255 = vmatpush1.bf16.xpose.msra.mxu0 0
    %256 = vmatprep.subr.bf16.mxu0 0
    %257 = vmatpush1.bf16.xpose.msra.mxu0 0
    %258 = vmatprep.subr.bf16.mxu0 0
    %259 = vmatpush1.bf16.xpose.msra.mxu0 0
    %260 = vmatprep.subr.bf16.mxu0 0
    %261 = vmatpush1.bf16.xpose.msra.mxu0 0
    %262 = vmatprep.subr.bf16.mxu0 0
    %263 = vmatpush1.bf16.xpose.msra.mxu0 0
    %264 = vmatprep.subr.bf16.mxu0 0
    %265 = vmatpush1.bf16.xpose.msra.mxu0 0
    %266 = vmatprep.subr.bf16.mxu0 0
    %267 = vmatpush1.bf16.xpose.msra.mxu0 0
    %268 = vmatprep.mubr.bf16.mxu0 0
    %269 = vmatmul.mubr.bf16.gmra.mrb[0].mxu0 %v231
    %v270 = vpop.f32.mrb[0].mxu0
    %v271 = vadd.f32 %v67, %v270
    %v272 = vpop.f32.mrb[0].mxu0
    %v273 = vpop.f32.mrb[0].mxu0
    %v274 = vadd.f32 %v68, %v273
    %v275 = vpop.f32.mrb[0].mxu0
    %276 = vdwg.mxu0
    %v277 = vsel %vm202, %v271, -inf
    %278 = vmax.xlane.f32.xlu0 %v277
    %v279 = vpop.xlane.xlu0 %278
    %v280 = vsel %vm202, %v274, -inf
    %281 = vmax.xlane.f32.xlu0 %v280
    %v282 = vpop.xlane.xlu0 %281
    %v283 = vsub.f32 %v271, %v279
    %v284 = vsub.f32 %v274, %v282
    %v285 = vmul.f32 %v283, 1.442695
    %v286 = vpow.pop %v285
    %v287 = vmul.f32 %v284, 1.442695
    %v288 = vpow.pop %v287
    %v289 = vsel %vm202, %v286, 0.0
    %290 = vadd.xlane.f32.xlu0 %v289
    %v291 = vpop.xlane.xlu0 %290
    %v292 = vsel %vm202, %v288, 0.0
    %293 = vadd.xlane.f32.xlu0 %v292
    %v294 = vpop.xlane.xlu0 %293
    %v295 = vrcp.pop %v291
    %v296 = vrcp.pop %v294
    %v297 = vmul.f32 %v286, %v295
    %v298 = vmul.f32 %v288, %v296
    %v299 = vpack.c.bf16 %v298, %v297
    %300 = vrot.lane.b32.xlu0 %v149, 32
    %v301 = vpop.permute.xlu0 %300
    %v304 = vsel %vm202, %v299, 0
    %306 = vmatprep.subr.bf16.mxu0 0
    %307 = vmatpush1.bf16.msra.mxu0 %v301
    %308 = vmatprep.subr.bf16.mxu0 0
    %309 = vmatpush1.bf16.msra.mxu0 0
    %310 = vmatprep.subr.bf16.mxu0 0
    %311 = vmatpush1.bf16.msra.mxu0 0
    %312 = vmatprep.subr.bf16.mxu0 0
    %313 = vmatpush1.bf16.msra.mxu0 0
    %314 = vmatprep.subr.bf16.mxu0 0
    %315 = vmatpush1.bf16.msra.mxu0 0
    %316 = vmatprep.subr.bf16.mxu0 0
    %317 = vmatpush1.bf16.msra.mxu0 0
    %318 = vmatprep.subr.bf16.mxu0 0
    %319 = vmatpush1.bf16.msra.mxu0 0
    %320 = vmatprep.subr.bf16.mxu0 0
    %321 = vmatpush1.bf16.msra.mxu0 0
    %322 = vmatprep.subr.bf16.mxu0 0
    %323 = vmatpush1.bf16.msra.mxu0 0
    %324 = vmatprep.subr.bf16.mxu0 0
    %325 = vmatpush1.bf16.msra.mxu0 0
    %326 = vmatprep.subr.bf16.mxu0 0
    %327 = vmatpush1.bf16.msra.mxu0 0
    %328 = vmatprep.subr.bf16.mxu0 0
    %329 = vmatpush1.bf16.msra.mxu0 0
    %330 = vmatprep.subr.bf16.mxu0 0
    %331 = vmatpush1.bf16.msra.mxu0 0
    %332 = vmatprep.subr.bf16.mxu0 0
    %333 = vmatpush1.bf16.msra.mxu0 0
    %334 = vmatprep.subr.bf16.mxu0 0
    %335 = vmatpush1.bf16.msra.mxu0 0
    %336 = vmatprep.subr.bf16.mxu0 0
    %337 = vmatpush1.bf16.msra.mxu0 0
    %338 = vmatprep.mubr.bf16.mxu0 0
    %339 = vmatmul.mubr.bf16.gmra.mrb[0].mxu0 %v304
    %v340 = vpop.f32.mrb[0].mxu0
    %v341 = vadd.f32 0.0, %v340
    %v342 = vpop.f32.mrb[0].mxu0
    %v343 = vpop.f32.mrb[0].mxu0
    %v344 = vadd.f32 0.0, %v343
    %v345 = vpop.f32.mrb[0].mxu0
    %346 = vdwg.mxu0
    %347 = vrot.lane.b32.xlu0 %v149, 64
    %v348 = vpop.permute.xlu0 %347
    %v351 = vsel %vm202, %v225, 0
    %353 = vmatprep.subr.bf16.mxu0 0
    %354 = vmatpush1.bf16.msra.mxu0 %v348
    %355 = vmatprep.subr.bf16.mxu0 0
    %356 = vmatpush1.bf16.msra.mxu0 0
    %357 = vmatprep.subr.bf16.mxu0 0
    %358 = vmatpush1.bf16.msra.mxu0 0
    %359 = vmatprep.subr.bf16.mxu0 0
    %360 = vmatpush1.bf16.msra.mxu0 0
    %361 = vmatprep.subr.bf16.mxu0 0
    %362 = vmatpush1.bf16.msra.mxu0 0
    %363 = vmatprep.subr.bf16.mxu0 0
    %364 = vmatpush1.bf16.msra.mxu0 0
    %365 = vmatprep.subr.bf16.mxu0 0
    %366 = vmatpush1.bf16.msra.mxu0 0
    %367 = vmatprep.subr.bf16.mxu0 0
    %368 = vmatpush1.bf16.msra.mxu0 0
    %369 = vmatprep.subr.bf16.mxu0 0
    %370 = vmatpush1.bf16.msra.mxu0 0
    %371 = vmatprep.subr.bf16.mxu0 0
    %372 = vmatpush1.bf16.msra.mxu0 0
    %373 = vmatprep.subr.bf16.mxu0 0
    %374 = vmatpush1.bf16.msra.mxu0 0
    %375 = vmatprep.subr.bf16.mxu0 0
    %376 = vmatpush1.bf16.msra.mxu0 0
    %377 = vmatprep.subr.bf16.mxu0 0
    %378 = vmatpush1.bf16.msra.mxu0 0
    %379 = vmatprep.subr.bf16.mxu0 0
    %380 = vmatpush1.bf16.msra.mxu0 0
    %381 = vmatprep.subr.bf16.mxu0 0
    %382 = vmatpush1.bf16.msra.mxu0 0
    %383 = vmatprep.subr.bf16.mxu0 0
    %384 = vmatpush1.bf16.msra.mxu0 0
    %385 = vmatprep.mubr.bf16.mxu0 0
    %386 = vmatmul.mubr.bf16.gmra.mrb[0].mxu0 %v351
    %v387 = vpop.f32.mrb[0].mxu0
    %v388 = vadd.f32 %v341, %v387
    %v389 = vpop.f32.mrb[0].mxu0
    %v390 = vpop.f32.mrb[0].mxu0
    %v391 = vadd.f32 %v344, %v390
    %v392 = vpop.f32.mrb[0].mxu0
    %393 = vdwg.mxu0
    %394 = vrot.lane.b32.xlu0 %v149, 112
    %v395 = vpop.permute.xlu0 %394
    %396 = vrot.lane.b32.xlu0 %v149, 80
    %v397 = vpop.permute.xlu0 %396
    %v399 = vsel %vm154, %v395, 0
    %v402 = vsel %vm154, %v397, 0
    %404 = vmatprep.subr.bf16.mxu0 0
    %405 = vmatpush1.bf16.xpose.msra.mxu0 %v402
    %406 = vmatprep.subr.bf16.mxu0 0
    %407 = vmatpush1.bf16.xpose.msra.mxu0 0
    %408 = vmatprep.subr.bf16.mxu0 0
    %409 = vmatpush1.bf16.xpose.msra.mxu0 0
    %410 = vmatprep.subr.bf16.mxu0 0
    %411 = vmatpush1.bf16.xpose.msra.mxu0 0
    %412 = vmatprep.subr.bf16.mxu0 0
    %413 = vmatpush1.bf16.xpose.msra.mxu0 0
    %414 = vmatprep.subr.bf16.mxu0 0
    %415 = vmatpush1.bf16.xpose.msra.mxu0 0
    %416 = vmatprep.subr.bf16.mxu0 0
    %417 = vmatpush1.bf16.xpose.msra.mxu0 0
    %418 = vmatprep.subr.bf16.mxu0 0
    %419 = vmatpush1.bf16.xpose.msra.mxu0 0
    %420 = vmatprep.subr.bf16.mxu0 0
    %421 = vmatpush1.bf16.xpose.msra.mxu0 0
    %422 = vmatprep.subr.bf16.mxu0 0
    %423 = vmatpush1.bf16.xpose.msra.mxu0 0
    %424 = vmatprep.subr.bf16.mxu0 0
    %425 = vmatpush1.bf16.xpose.msra.mxu0 0
    %426 = vmatprep.subr.bf16.mxu0 0
    %427 = vmatpush1.bf16.xpose.msra.mxu0 0
    %428 = vmatprep.subr.bf16.mxu0 0
    %429 = vmatpush1.bf16.xpose.msra.mxu0 0
    %430 = vmatprep.subr.bf16.mxu0 0
    %431 = vmatpush1.bf16.xpose.msra.mxu0 0
    %432 = vmatprep.subr.bf16.mxu0 0
    %433 = vmatpush1.bf16.xpose.msra.mxu0 0
    %434 = vmatprep.subr.bf16.mxu0 0
    %435 = vmatpush1.bf16.xpose.msra.mxu0 0
    %436 = vmatprep.mubr.bf16.mxu0 0
    %437 = vmatmul.mubr.bf16.gmra.mrb[0].mxu0 %v399
    %v438 = vpop.f32.mrb[0].mxu0
    %v439 = vadd.f32 %v67, %v438
    %v440 = vpop.f32.mrb[0].mxu0
    %v441 = vpop.f32.mrb[0].mxu0
    %v442 = vadd.f32 %v68, %v441
    %v443 = vpop.f32.mrb[0].mxu0
    %444 = vdwg.mxu0
    %v445 = vsel %vm202, %v439, -inf
    %446 = vmax.xlane.f32.xlu0 %v445
    %v447 = vpop.xlane.xlu0 %446
    %v448 = vsel %vm202, %v442, -inf
    %449 = vmax.xlane.f32.xlu0 %v448
    %v450 = vpop.xlane.xlu0 %449
    %v451 = vsub.f32 %v439, %v447
    %v452 = vsub.f32 %v442, %v450
    %v453 = vmul.f32 %v451, 1.442695
    %v454 = vpow.pop %v453
    %v455 = vmul.f32 %v452, 1.442695
    %v456 = vpow.pop %v455
    %v457 = vsel %vm202, %v454, 0.0
    %458 = vadd.xlane.f32.xlu0 %v457
    %v459 = vpop.xlane.xlu0 %458
    %v460 = vsel %vm202, %v456, 0.0
    %461 = vadd.xlane.f32.xlu0 %v460
    %v462 = vpop.xlane.xlu0 %461
    %v463 = vrcp.pop %v459
    %v464 = vrcp.pop %v462
    %v465 = vmul.f32 %v454, %v463
    %v466 = vmul.f32 %v456, %v464
    %v467 = vpack.c.bf16 %v466, %v465
    %v469 = vsel %vm202, %v467, 0
    %471 = vmatprep.subr.bf16.mxu0 0
    %472 = vmatpush1.bf16.msra.mxu0 %v150
    %473 = vmatprep.subr.bf16.mxu0 0
    %474 = vmatpush1.bf16.msra.mxu0 0
    %475 = vmatprep.subr.bf16.mxu0 0
    %476 = vmatpush1.bf16.msra.mxu0 0
    %477 = vmatprep.subr.bf16.mxu0 0
    %478 = vmatpush1.bf16.msra.mxu0 0
    %479 = vmatprep.subr.bf16.mxu0 0
    %480 = vmatpush1.bf16.msra.mxu0 0
    %481 = vmatprep.subr.bf16.mxu0 0
    %482 = vmatpush1.bf16.msra.mxu0 0
    %483 = vmatprep.subr.bf16.mxu0 0
    %484 = vmatpush1.bf16.msra.mxu0 0
    %485 = vmatprep.subr.bf16.mxu0 0
    %486 = vmatpush1.bf16.msra.mxu0 0
    %487 = vmatprep.subr.bf16.mxu0 0
    %488 = vmatpush1.bf16.msra.mxu0 0
    %489 = vmatprep.subr.bf16.mxu0 0
    %490 = vmatpush1.bf16.msra.mxu0 0
    %491 = vmatprep.subr.bf16.mxu0 0
    %492 = vmatpush1.bf16.msra.mxu0 0
    %493 = vmatprep.subr.bf16.mxu0 0
    %494 = vmatpush1.bf16.msra.mxu0 0
    %495 = vmatprep.subr.bf16.mxu0 0
    %496 = vmatpush1.bf16.msra.mxu0 0
    %497 = vmatprep.subr.bf16.mxu0 0
    %498 = vmatpush1.bf16.msra.mxu0 0
    %499 = vmatprep.subr.bf16.mxu0 0
    %500 = vmatpush1.bf16.msra.mxu0 0
    %501 = vmatprep.subr.bf16.mxu0 0
    %502 = vmatpush1.bf16.msra.mxu0 0
    %503 = vmatprep.mubr.bf16.mxu0 0
    %504 = vmatmul.mubr.bf16.gmra.mrb[0].mxu0 %v469
    %v505 = vpop.f32.mrb[0].mxu0
    %v506 = vadd.f32 0.0, %v505
    %v507 = vpop.f32.mrb[0].mxu0
    %v508 = vpop.f32.mrb[0].mxu0
    %v509 = vadd.f32 0.0, %v508
    %v510 = vpop.f32.mrb[0].mxu0
    %511 = vdwg.mxu0
    %v512 = vadd.f32 %v388, %v506
    %v513 = vadd.f32 %v391, %v509
    %514 = vrot.lane.b32.xlu0 %v149, 104
    %v515 = vpop.permute.xlu0 %514
    %516 = vrot.lane.b32.xlu0 %v149, 72
    %v517 = vpop.permute.xlu0 %516
    %v519 = vsel %vm154, %v515, 0
    %v522 = vsel %vm154, %v517, 0
    %524 = vmatprep.subr.bf16.mxu0 0
    %525 = vmatpush1.bf16.xpose.msra.mxu0 %v522
    %526 = vmatprep.subr.bf16.mxu0 0
    %527 = vmatpush1.bf16.xpose.msra.mxu0 0
    %528 = vmatprep.subr.bf16.mxu0 0
    %529 = vmatpush1.bf16.xpose.msra.mxu0 0
    %530 = vmatprep.subr.bf16.mxu0 0
    %531 = vmatpush1.bf16.xpose.msra.mxu0 0
    %532 = vmatprep.subr.bf16.mxu0 0
    %533 = vmatpush1.bf16.xpose.msra.mxu0 0
    %534 = vmatprep.subr.bf16.mxu0 0
    %535 = vmatpush1.bf16.xpose.msra.mxu0 0
    %536 = vmatprep.subr.bf16.mxu0 0
    %537 = vmatpush1.bf16.xpose.msra.mxu0 0
    %538 = vmatprep.subr.bf16.mxu0 0
    %539 = vmatpush1.bf16.xpose.msra.mxu0 0
    %540 = vmatprep.subr.bf16.mxu0 0
    %541 = vmatpush1.bf16.xpose.msra.mxu0 0
    %542 = vmatprep.subr.bf16.mxu0 0
    %543 = vmatpush1.bf16.xpose.msra.mxu0 0
    %544 = vmatprep.subr.bf16.mxu0 0
    %545 = vmatpush1.bf16.xpose.msra.mxu0 0
    %546 = vmatprep.subr.bf16.mxu0 0
    %547 = vmatpush1.bf16.xpose.msra.mxu0 0
    %548 = vmatprep.subr.bf16.mxu0 0
    %549 = vmatpush1.bf16.xpose.msra.mxu0 0
    %550 = vmatprep.subr.bf16.mxu0 0
    %551 = vmatpush1.bf16.xpose.msra.mxu0 0
    %552 = vmatprep.subr.bf16.mxu0 0
    %553 = vmatpush1.bf16.xpose.msra.mxu0 0
    %554 = vmatprep.subr.bf16.mxu0 0
    %555 = vmatpush1.bf16.xpose.msra.mxu0 0
    %556 = vmatprep.mubr.bf16.mxu0 0
    %557 = vmatmul.mubr.bf16.gmra.mrb[0].mxu0 %v519
    %v558 = vpop.f32.mrb[0].mxu0
    %v559 = vadd.f32 %v67, %v558
    %v560 = vpop.f32.mrb[0].mxu0
    %v561 = vpop.f32.mrb[0].mxu0
    %v562 = vadd.f32 %v68, %v561
    %v563 = vpop.f32.mrb[0].mxu0
    %564 = vdwg.mxu0
    %v565 = vsel %vm202, %v559, -inf
    %566 = vmax.xlane.f32.xlu0 %v565
    %v567 = vpop.xlane.xlu0 %566
    %v568 = vsel %vm202, %v562, -inf
    %569 = vmax.xlane.f32.xlu0 %v568
    %v570 = vpop.xlane.xlu0 %569
    %v571 = vsub.f32 %v559, %v567
    %v572 = vsub.f32 %v562, %v570
    %v573 = vmul.f32 %v571, 1.442695
    %v574 = vpow.pop %v573
    %v575 = vmul.f32 %v572, 1.442695
    %v576 = vpow.pop %v575
    %v577 = vsel %vm202, %v574, 0.0
    %578 = vadd.xlane.f32.xlu0 %v577
    %v579 = vpop.xlane.xlu0 %578
    %v580 = vsel %vm202, %v576, 0.0
    %581 = vadd.xlane.f32.xlu0 %v580
    %v582 = vpop.xlane.xlu0 %581
    %v583 = vrcp.pop %v579
    %v584 = vrcp.pop %v582
    %v585 = vmul.f32 %v574, %v583
    %v586 = vmul.f32 %v576, %v584
    %v587 = vpack.c.bf16 %v586, %v585
    %589 = vrot.lane.b32.xlu0 %v150, 96
    %v590 = vpop.permute.xlu0 %589
    %v593 = vsel %vm202, %v587, 0
    %595 = vmatprep.subr.bf16.mxu0 0
    %596 = vmatpush1.bf16.msra.mxu0 %v590
    %597 = vmatprep.subr.bf16.mxu0 0
    %598 = vmatpush1.bf16.msra.mxu0 0
    %599 = vmatprep.subr.bf16.mxu0 0
    %600 = vmatpush1.bf16.msra.mxu0 0
    %601 = vmatprep.subr.bf16.mxu0 0
    %602 = vmatpush1.bf16.msra.mxu0 0
    %603 = vmatprep.subr.bf16.mxu0 0
    %604 = vmatpush1.bf16.msra.mxu0 0
    %605 = vmatprep.subr.bf16.mxu0 0
    %606 = vmatpush1.bf16.msra.mxu0 0
    %607 = vmatprep.subr.bf16.mxu0 0
    %608 = vmatpush1.bf16.msra.mxu0 0
    %609 = vmatprep.subr.bf16.mxu0 0
    %610 = vmatpush1.bf16.msra.mxu0 0
    %611 = vmatprep.subr.bf16.mxu0 0
    %612 = vmatpush1.bf16.msra.mxu0 0
    %613 = vmatprep.subr.bf16.mxu0 0
    %614 = vmatpush1.bf16.msra.mxu0 0
    %615 = vmatprep.subr.bf16.mxu0 0
    %616 = vmatpush1.bf16.msra.mxu0 0
    %617 = vmatprep.subr.bf16.mxu0 0
    %618 = vmatpush1.bf16.msra.mxu0 0
    %619 = vmatprep.subr.bf16.mxu0 0
    %620 = vmatpush1.bf16.msra.mxu0 0
    %621 = vmatprep.subr.bf16.mxu0 0
    %622 = vmatpush1.bf16.msra.mxu0 0
    %623 = vmatprep.subr.bf16.mxu0 0
    %624 = vmatpush1.bf16.msra.mxu0 0
    %625 = vmatprep.subr.bf16.mxu0 0
    %626 = vmatpush1.bf16.msra.mxu0 0
    %627 = vmatprep.mubr.bf16.mxu0 0
    %628 = vmatmul.mubr.bf16.gmra.mrb[0].mxu0 %v593
    %v629 = vpop.f32.mrb[0].mxu0
    %v630 = vadd.f32 0.0, %v629
    %v631 = vpop.f32.mrb[0].mxu0
    %v632 = vpop.f32.mrb[0].mxu0
    %v633 = vadd.f32 0.0, %v632
    %v634 = vpop.f32.mrb[0].mxu0
    %635 = vdwg.mxu0
    %v636 = vadd.f32 %v512, %v630
    %v637 = vadd.f32 %v513, %v633
    %v638 = vlaneseq
    %v639 = vshrl.u32 %v638, 7
    %v640 = vsub.s32 1, %v639
    %v641 = vrot.slane %v65, %v640
    %v642 = vadd.f32 %v636, %v641
    %v643 = vadd.f32 %v637, %v641
    %v644 = vadd.f32 %v63, %v642
    %v645 = vadd.f32 %v64, %v643
    %v646 = vsel %vm102, %v644, 0.0
    %647 = vadd.xlane.f32.xlu0 %v646
    %v648 = vpop.xlane.xlu0 %647
    %v649 = vsel %vm102, %v645, 0.0
    %650 = vadd.xlane.f32.xlu0 %v649
    %v651 = vpop.xlane.xlu0 %650
    %v652 = vrcp.pop 32.0
    %v653 = vmul.f32 %v648, %v652
    %v654 = vmul.f32 %v651, %v652
    %v655 = vsub.f32 %v644, %v653
    %v656 = vsub.f32 %v645, %v654
    %v657 = vmul.f32 %v655, %v655
    %v658 = vmul.f32 %v656, %v656
    %v659 = vsel %vm102, %v657, 0.0
    %660 = vadd.xlane.f32.xlu0 %v659
    %v661 = vpop.xlane.xlu0 %660
    %v662 = vsel %vm102, %v658, 0.0
    %663 = vadd.xlane.f32.xlu0 %v662
    %v664 = vpop.xlane.xlu0 %663
    %v665 = vmul.f32 %v661, %v652
    %v666 = vmul.f32 %v664, %v652
    %v667 = vadd.f32 %v665, 1e-05
    %v668 = vadd.f32 %v666, 1e-05
    %v669 = vrsqrt.pop %v667
    %v670 = vrsqrt.pop %v668
    %v671 = vmul.f32 %v655, %v669
    %v672 = vmul.f32 %v656, %v670
    %v673 = vlaneseq
    %v674 = vshrl.u32 %v673, 7
    %v675 = vsub.s32 2, %v674
    %v676 = vrot.slane %v65, %v675
    %v677 = vmul.f32 %v671, %v676
    %v678 = vmul.f32 %v672, %v676
    %v679 = vlaneseq
    %v680 = vshrl.u32 %v679, 7
    %v681 = vsub.s32 3, %v680
    %v682 = vrot.slane %v65, %v681
    %v683 = vadd.f32 %v677, %v682
    %v684 = vadd.f32 %v678, %v682
    %v685 = vpack.c.bf16 %v684, %v683
    %v686 = vld [vmem:[#allocation7] sm:$0xf]
    %v687 = vld [vmem:[#allocation7 + $0x4] sm:$0xf]
    %v688 = vld [vmem:[#allocation7 + $0x8] sm:$0xf]
    %v689 = vld [vmem:[#allocation7 + $0xc] sm:$0xf]
    %v690 = vlaneseq
    %v691 = vshrl.u32 %v690, 7
    %v692 = vsub.s32 4, %v691
    %v693 = vrot.slane %v65, %v692
    %v698 = vunpack.c.l.b16 %v686
    %v699 = vunpack.c.l.b16 %v687
    %v700 = vunpack.c.l.b16 %v688
    %v701 = vunpack.c.l.b16 %v689
    %v702 = vpack.c.b16 %v699, %v698
    %v703 = vpack.c.b16 %v701, %v700
    %v707 = vsel %vm102, %v685, 0
    %709 = vmatprep.subr.bf16.mxu0 0
    %710 = vmatpush1.bf16.msra.mxu0 %v702
    %711 = vmatprep.subr.bf16.mxu0 0
    %712 = vmatpush1.bf16.msra.mxu0 %v703
    %713 = vmatprep.subr.bf16.mxu0 0
    %714 = vmatpush1.bf16.msra.mxu0 0
    %715 = vmatprep.subr.bf16.mxu0 0
    %716 = vmatpush1.bf16.msra.mxu0 0
    %717 = vmatprep.subr.bf16.mxu0 0
    %718 = vmatpush1.bf16.msra.mxu0 0
    %719 = vmatprep.subr.bf16.mxu0 0
    %720 = vmatpush1.bf16.msra.mxu0 0
    %721 = vmatprep.subr.bf16.mxu0 0
    %722 = vmatpush1.bf16.msra.mxu0 0
    %723 = vmatprep.subr.bf16.mxu0 0
    %724 = vmatpush1.bf16.msra.mxu0 0
    %725 = vmatprep.subr.bf16.mxu0 0
    %726 = vmatpush1.bf16.msra.mxu0 0
    %727 = vmatprep.subr.bf16.mxu0 0
    %728 = vmatpush1.bf16.msra.mxu0 0
    %729 = vmatprep.subr.bf16.mxu0 0
    %730 = vmatpush1.bf16.msra.mxu0 0
    %731 = vmatprep.subr.bf16.mxu0 0
    %732 = vmatpush1.bf16.msra.mxu0 0
    %733 = vmatprep.subr.bf16.mxu0 0
    %734 = vmatpush1.bf16.msra.mxu0 0
    %735 = vmatprep.subr.bf16.mxu0 0
    %736 = vmatpush1.bf16.msra.mxu0 0
    %737 = vmatprep.subr.bf16.mxu0 0
    %738 = vmatpush1.bf16.msra.mxu0 0
    %739 = vmatprep.subr.bf16.mxu0 0
    %740 = vmatpush1.bf16.msra.mxu0 0
    %741 = vmatprep.mubr.bf16.mxu0 0
    %742 = vmatmul.mubr.bf16.gmra.mrb[0].mxu0 %v707
    %v743 = vpop.f32.mrb[0].mxu0
    %v744 = vadd.f32 %v693, %v743
    %v745 = vpop.f32.mrb[0].mxu0
    %v746 = vpop.f32.mrb[0].mxu0
    %v747 = vadd.f32 %v693, %v746
    %v748 = vpop.f32.mrb[0].mxu0
    %749 = vdwg.mxu0
    %v750 = vmax.f32 %v744, 0.0
    %v751 = vmax.f32 %v747, 0.0
    %v752 = vpack.c.bf16 %v751, %v750
    %v753 = vld [vmem:[%s3] sm:$0xf]
    %v754 = vld [vmem:[%s3 + $0x4] sm:$0xf]
    %v755 = vld [vmem:[%s3 + $0x8] sm:$0xf]
    %v756 = vld [vmem:[%s3 + $0xc] sm:$0xf]
    %v757 = vld [vmem:[%s3 + $0x10] sm:$0xf]
    %v758 = vld [vmem:[%s3 + $0x14] sm:$0xf]
    %v759 = vld [vmem:[%s3 + $0x18] sm:$0xf]
    %v760 = vld [vmem:[%s3 + $0x1c] sm:$0xf]
    %v761 = vlaneseq
    %v762 = vshrl.u32 %v761, 7
    %v763 = vsub.s32 5, %v762
    %v764 = vrot.slane %v65, %v763
    %v773 = vunpack.c.l.b16 %v753
    %v774 = vunpack.c.l.b16 %v754
    %v775 = vunpack.c.l.b16 %v755
    %v776 = vunpack.c.l.b16 %v756
    %v777 = vunpack.c.l.b16 %v757
    %v778 = vunpack.c.l.b16 %v758
    %v779 = vunpack.c.l.b16 %v759
    %v780 = vunpack.c.l.b16 %v760
    %v781 = vpack.c.b16 %v774, %v773
    %v782 = vpack.c.b16 %v776, %v775
    %v783 = vpack.c.b16 %v778, %v777
    %v784 = vpack.c.b16 %v780, %v779
    %vm789 = vcmask 523264
    %v791 = vsel %vm789, %v752, 0
    %793 = vmatprep.subr.bf16.mxu0 0
    %794 = vmatpush1.bf16.msra.mxu0 %v781
    %795 = vmatprep.subr.bf16.mxu0 0
    %796 = vmatpush1.bf16.msra.mxu0 %v782
    %797 = vmatprep.subr.bf16.mxu0 0
    %798 = vmatpush1.bf16.msra.mxu0 %v783
    %799 = vmatprep.subr.bf16.mxu0 0
    %800 = vmatpush1.bf16.msra.mxu0 %v784
    %801 = vmatprep.subr.bf16.mxu0 0
    %802 = vmatpush1.bf16.msra.mxu0 0
    %803 = vmatprep.subr.bf16.mxu0 0
    %804 = vmatpush1.bf16.msra.mxu0 0
    %805 = vmatprep.subr.bf16.mxu0 0
    %806 = vmatpush1.bf16.msra.mxu0 0
    %807 = vmatprep.subr.bf16.mxu0 0
    %808 = vmatpush1.bf16.msra.mxu0 0
    %809 = vmatprep.subr.bf16.mxu0 0
    %810 = vmatpush1.bf16.msra.mxu0 0
    %811 = vmatprep.subr.bf16.mxu0 0
    %812 = vmatpush1.bf16.msra.mxu0 0
    %813 = vmatprep.subr.bf16.mxu0 0
    %814 = vmatpush1.bf16.msra.mxu0 0
    %815 = vmatprep.subr.bf16.mxu0 0
    %816 = vmatpush1.bf16.msra.mxu0 0
    %817 = vmatprep.subr.bf16.mxu0 0
    %818 = vmatpush1.bf16.msra.mxu0 0
    %819 = vmatprep.subr.bf16.mxu0 0
    %820 = vmatpush1.bf16.msra.mxu0 0
    %821 = vmatprep.subr.bf16.mxu0 0
    %822 = vmatpush1.bf16.msra.mxu0 0
    %823 = vmatprep.subr.bf16.mxu0 0
    %824 = vmatpush1.bf16.msra.mxu0 0
    %825 = vmatprep.mubr.bf16.mxu0 0
    %826 = vmatmul.mubr.bf16.gmra.mrb[0].mxu0 %v791
    %v827 = vpop.f32.mrb[0].mxu0
    %v828 = vadd.f32 %v764, %v827
    %v829 = vpop.f32.mrb[0].mxu0
    %v830 = vpop.f32.mrb[0].mxu0
    %v831 = vadd.f32 %v764, %v830
    %v832 = vpop.f32.mrb[0].mxu0
    %833 = vdwg.mxu0
    %v834 = vadd.f32 %v683, %v828
    %v835 = vadd.f32 %v684, %v831
    %v836 = vsel %vm102, %v834, 0.0
    %837 = vadd.xlane.f32.xlu0 %v836
    %v838 = vpop.xlane.xlu0 %837
    %v839 = vsel %vm102, %v835, 0.0
    %840 = vadd.xlane.f32.xlu0 %v839
    %v841 = vpop.xlane.xlu0 %840
    %v842 = vmul.f32 %v838, %v652
    %v843 = vmul.f32 %v841, %v652
    %v844 = vsub.f32 %v834, %v842
    %v845 = vsub.f32 %v835, %v843
    %v846 = vmul.f32 %v844, %v844
    %v847 = vmul.f32 %v845, %v845
    %v848 = vsel %vm102, %v846, 0.0
    %849 = vadd.xlane.f32.xlu0 %v848
    %v850 = vpop.xlane.xlu0 %849
    %v851 = vsel %vm102, %v847, 0.0
    %852 = vadd.xlane.f32.xlu0 %v851
    %v853 = vpop.xlane.xlu0 %852
    %v854 = vmul.f32 %v850, %v652
    %v855 = vmul.f32 %v853, %v652
    %v856 = vadd.f32 %v854, 1e-05
    %v857 = vadd.f32 %v855, 1e-05
    %v858 = vrsqrt.pop %v856
    %v859 = vrsqrt.pop %v857
    %v860 = vmul.f32 %v844, %v858
    %v861 = vmul.f32 %v845, %v859
    %v862 = vlaneseq
    %v863 = vshrl.u32 %v862, 7
    %v864 = vsub.s32 6, %v863
    %v865 = vrot.slane %v65, %v864
    %v866 = vmul.f32 %v860, %v865
    %v867 = vmul.f32 %v861, %v865
    %v868 = vlaneseq
    %v869 = vshrl.u32 %v868, 7
    %v870 = vsub.s32 7, %v869
    %v871 = vrot.slane %v65, %v870
    %v872 = vadd.f32 %v866, %v871
    %v873 = vadd.f32 %v867, %v871
    %874 = vst.msk [vmem:[#allocation8] sm:$0xff] %vm102, %v872
    %875 = vst.msk [vmem:[#allocation8 + $0x8] sm:$0xff] %vm102, %v873
    // Predicated region
    $region34: #{tpu_custom_call.1} parent=1 // pred_check
      _
    $region35: #{tpu_custom_call.1} parent=1 // pred_check_branch
      %877 = sbr.rel (0) target = $region37
    $region36: #{tpu_custom_call.1} parent=1 // pred_region
      %s879 = ssub.s32 256, 256
      %880 = vsyncadd [#allocation4], %s879
      %s881 = sshll.u32 [#allocation8], 4
      %s882 = int_to_ptr.vmem [resolvable:$true] %s881
      %887 = dma.vmem_to_hbm [thread:$0]  %s882, 256, %s5, [#allocation4], 128, 128, 8
    $region37: #{tpu_custom_call.1} parent=1 // pred_fallthru
      _
    // Predicated region
    $region38: #{tpu_custom_call.1} parent=1 // pred_check
      _
    $region39: #{tpu_custom_call.1} parent=1 // pred_check_branch
      %889 = sbr.rel (0) target = $region41
    $region40: #{tpu_custom_call.1} parent=1 // pred_region
      %890 = dma.done [#allocation4], 256
    $region41: #{tpu_custom_call.1} parent=1 // pred_fallthru
      _
    %891 = vsyncpa [#allocation3], 1
    %892 = vsyncpa [#allocation6], 1
    %893 = vsyncpa [#allocation4], 1

</llo_original>
